<compile_context>
chip_gen: v7x
topology: tpu7x:2x2x1
jax: 0.10.0
libtpu: 0.0.40
codegen_flags: <defaults>
</compile_context>

<pallas_src>
import functools

import jax
import jax.numpy as jnp
from jax.experimental import pallas as pl
from jax.experimental.pallas import tpu as pltpu


def _ln_kernel(*refs, bias_free: bool, eps: float):
    if bias_free:
        x_ref, w_ref, o_ref = refs
        b_ref = None
    else:
        x_ref, w_ref, b_ref, o_ref = refs

    # (1, C, T): C on sublanes, T on lanes. All math in f32, single final cast.
    x = x_ref[...].astype(jnp.float32)
    c = x.shape[1]
    inv_c = jnp.float32(1.0 / c)

    # Single reduction sweep over the channel (sublane) axis.
    s1 = jnp.sum(x, axis=1, keepdims=True)            # (1, 1, T)  sum(x)
    s2 = jnp.sum(x * x, axis=1, keepdims=True)        # (1, 1, T)  sum(x^2)
    mu = s1 * inv_c
    var = s2 * inv_c - mu * mu                        # population variance
    var = jnp.maximum(var, 0.0)                       # guard f32 cancellation
    inv = jax.lax.rsqrt(var + eps)                    # (1, 1, T)

    w = w_ref[...].astype(jnp.float32)                # (1, C, 1)
    if bias_free:
        # Note: no mean subtraction in the numerator (torch BiasFree semantics).
        y = x * inv * w
    else:
        y = (x - mu) * inv * w + b_ref[...].astype(jnp.float32)

    o_ref[...] = y.astype(o_ref.dtype)


def _vmem_capacity_bytes() -> int:
    try:
        return int(pltpu.get_tpu_info().vmem_capacity_bytes)
    except Exception:
        return 128 * 1024 * 1024                      # conservative fallback (v5e/v6e)


def _pick_hw_tile(hw: int, c: int, itemsize: int, batch: int, vmem_cap: int) -> int:
    """Spatial (lane) tile: multiple of 128, sized against a VMEM working-set budget,
    with enough grid steps for the 2-TC split and pipeline overlap."""
    # Per lane-column bytes: double-buffered input + double-buffered output (input
    # dtype) plus ~2 f32 temporaries inside the kernel.
    per_lane = c * (4 * itemsize + 8)

    if vmem_cap <= 64 * 1024 * 1024:                  # v7x: 64 MiB VMEM per TC
        budget = 22 * 1024 * 1024
    else:                                             # v5e / v6e: 128 MiB VMEM
        budget = 40 * 1024 * 1024

    max_t = max(128, min(budget // per_lane, 16384))
    max_t = (max_t // 128) * 128

    if hw <= 128:
        return hw                                     # tiny spatial: one (masked) block

    # Lane-dense tile: largest multiple of 128 <= min(hw, max_t); only the ragged
    # tail block (if any) uses masked stores.
    t = (min(hw, max_t) // 128) * 128

    # Ensure >= 4 total grid steps (>= 2 per TensorCore on v7x, and enough steps for
    # the double-buffer pipeline to overlap DMA with compute).
    min_steps = 4
    while batch * pl.cdiv(hw, t) < min_steps and t > 128:
        t = max(128, ((t // 2) // 128) * 128)
    return t


def layernorm_nchw(x, weight, bias=None, *, layernorm_type: str = "WithBias",
                   eps: float = 1e-5):
    """Full module forward: x is NCHW; normalization is over the C axis."""
    b, c, h, w = x.shape
    hw = h * w
    bias_free = (layernorm_type == "BiasFree")

    x3 = x.reshape(b, c, hw)                          # metadata-only (NCHW row-major)
    w3 = weight.reshape(1, c, 1)

    vmem_cap = _vmem_capacity_bytes()
    itemsize = jnp.dtype(x.dtype).itemsize
    t_hw = _pick_hw_tile(hw, c, itemsize, b, vmem_cap)
    grid = (b, pl.cdiv(hw, t_hw))

    x_spec = pl.BlockSpec((1, c, t_hw), lambda bi, j: (bi, 0, j))
    p_spec = pl.BlockSpec((1, c, 1), lambda bi, j: (0, 0, 0))     # resident params
    # TODO(synk): if a trace shows exposed input DMA on v5e/v6e at large tiles, add
    # pipeline_mode=pl.Buffered(3) to x_spec (VMEM budget permitting).

    if bias_free:
        in_specs = [x_spec, p_spec]
        operands = (x3, w3)
    else:
        assert bias is not None
        in_specs = [x_spec, p_spec, p_spec]
        operands = (x3, w3, bias.reshape(1, c, 1))

    n_elem = b * c * hw
    cost = pl.CostEstimate(
        flops=8 * n_elem,
        transcendentals=b * hw,
        bytes_accessed=2 * n_elem * itemsize
        + (1 if bias_free else 2) * c * jnp.dtype(weight.dtype).itemsize,
    )

    vmem_limit = (48 * 1024 * 1024 if vmem_cap <= 64 * 1024 * 1024
                  else 64 * 1024 * 1024)

    out = pl.pallas_call(
        functools.partial(_ln_kernel, bias_free=bias_free, eps=eps),
        out_shape=jax.ShapeDtypeStruct((b, c, hw), x.dtype),
        grid_spec=pltpu.PrefetchScalarGridSpec(
            num_scalar_prefetch=0,
            grid=grid,
            in_specs=in_specs,
            out_specs=pl.BlockSpec((1, c, t_hw), lambda bi, j: (bi, 0, j)),
        ),
        compiler_params=pltpu.CompilerParams(
            dimension_semantics=("parallel", "parallel"),
            vmem_limit_bytes=vmem_limit,
        ),
        cost_estimate=cost,
    )(*operands)

    return out.reshape(b, c, h, w)


def _reference(x, weight, bias, *, layernorm_type: str = "WithBias"):
    b, c, h, w = x.shape
    x3 = jnp.transpose(x, (0, 2, 3, 1)).reshape(b, h * w, c).astype(jnp.float32)
    if layernorm_type == "BiasFree":
        var = jnp.var(x3, axis=-1, keepdims=True)
        y3 = x3 / jnp.sqrt(var + 1e-5) * weight
    else:
        mu = jnp.mean(x3, axis=-1, keepdims=True)
        var = jnp.var(x3, axis=-1, keepdims=True)
        y3 = (x3 - mu) / jnp.sqrt(var + 1e-5) * weight + bias
    return y3.reshape(b, h, w, c).transpose(0, 3, 1, 2).astype(x.dtype)


if __name__ == "__main__":
    key = jax.random.PRNGKey(0)
    kx, kw, kb = jax.random.split(key, 3)

    B, C, H, W = 2, 4, 16, 16
    x = jax.random.normal(kx, (B, C, H, W), dtype=jnp.float32)

    # Parameters (module __init__: weight=ones, bias=zeros), perturbed
    # deterministically so the affine path is exercised.
    weight = jnp.ones((C,), jnp.float32) + 0.1 * jax.random.normal(kw, (C,))
    bias = jnp.zeros((C,), jnp.float32) + 0.1 * jax.random.normal(kb, (C,))

    # WithBias variant (LayerNorm(dim, LayerNorm_type) with anything != 'BiasFree')
    y = layernorm_nchw(x, weight, bias, layernorm_type="WithBias")
    jax.block_until_ready(y)
    y_ref = _reference(x, weight, bias, layernorm_type="WithBias")
    assert y.shape == (B, C, H, W)
    assert jnp.allclose(y, y_ref, atol=1e-5, rtol=1e-5), "WithBias mismatch"

    # BiasFree variant (no bias operand is passed or DMA'd)
    y_bf = layernorm_nchw(x, weight, layernorm_type="BiasFree")
    jax.block_until_ready(y_bf)
    y_bf_ref = _reference(x, weight, bias, layernorm_type="BiasFree")
    assert jnp.allclose(y_bf, y_bf_ref, atol=1e-5, rtol=1e-5), "BiasFree mismatch"

    # bf16 input exercising the f32-normalize / single-final-cast path.
    xb = x.astype(jnp.bfloat16)
    yb = layernorm_nchw(xb, weight, bias, layernorm_type="WithBias")
    jax.block_until_ready(yb)
    yb_ref = _reference(xb, weight, bias, layernorm_type="WithBias")
    assert jnp.allclose(yb.astype(jnp.float32), yb_ref.astype(jnp.float32),
                        atol=3e-2, rtol=3e-2), "bf16 WithBias mismatch"

    print("KERNEL_OK")
</pallas_src>

<mosaic_0001>
module attributes {stable_mosaic.version = 11 : i64} {
  func.func @_ln_kernel(%arg0: i32, %arg1: i32, %arg2: memref<1x4x128xf32, #tpu.memory_space<vmem>>, %arg3: memref<1x4x1xf32, #tpu.memory_space<vmem>>, %arg4: memref<1x4x1xf32, #tpu.memory_space<vmem>>, %arg5: memref<1x4x128xf32, #tpu.memory_space<vmem>>) attributes {dimension_semantics = [#tpu.dimension_semantics<parallel>, #tpu.dimension_semantics<parallel>], iteration_bounds = array<i64: 2, 2>, scalar_prefetch = 0 : i64, scratch_operands = 0 : i64, tpu.core_type = #tpu.core_type<tc>, window_params = [{transform_indices = @transform_0, window_bounds = array<i64: 1, 4, 128>}, {pipeline_mode = #tpu.pipeline_mode<synchronous>, transform_indices = @transform_1, window_bounds = array<i64: 1, 4, 1>}, {pipeline_mode = #tpu.pipeline_mode<synchronous>, transform_indices = @transform_2, window_bounds = array<i64: 1, 4, 1>}, {transform_indices = @transform_3, window_bounds = array<i64: 1, 4, 128>}]} {
    %c0 = arith.constant 0 : index
    %c0_0 = arith.constant 0 : index
    %c0_1 = arith.constant 0 : index
    %0 = vector.load %arg2[%c0, %c0_0, %c0_1] : memref<1x4x128xf32, #tpu.memory_space<vmem>>, vector<1x4x128xf32>
    %cst = arith.constant dense<0.000000e+00> : vector<1x128xf32>
    %1 = vector.multi_reduction <add>, %0, %cst [1] : vector<1x4x128xf32> to vector<1x128xf32>
    %2 = vector.shape_cast %1 : vector<1x128xf32> to vector<1x1x128xf32>
    %3 = arith.mulf %0, %0 : vector<1x4x128xf32>
    %cst_2 = arith.constant dense<0.000000e+00> : vector<1x128xf32>
    %4 = vector.multi_reduction <add>, %3, %cst_2 [1] : vector<1x4x128xf32> to vector<1x128xf32>
    %5 = vector.shape_cast %4 : vector<1x128xf32> to vector<1x1x128xf32>
    %cst_3 = arith.constant 2.500000e-01 : f32
    %6 = vector.broadcast %cst_3 : f32 to vector<1x1x128xf32>
    %7 = arith.mulf %2, %6 : vector<1x1x128xf32>
    %cst_4 = arith.constant 2.500000e-01 : f32
    %8 = vector.broadcast %cst_4 : f32 to vector<1x1x128xf32>
    %9 = arith.mulf %5, %8 : vector<1x1x128xf32>
    %10 = arith.mulf %7, %7 : vector<1x1x128xf32>
    %11 = arith.subf %9, %10 : vector<1x1x128xf32>
    %cst_5 = arith.constant 0.000000e+00 : f32
    %12 = vector.broadcast %cst_5 : f32 to vector<1x1x128xf32>
    %13 = arith.maximumf %11, %12 : vector<1x1x128xf32>
    %cst_6 = arith.constant 9.99999974E-6 : f32
    %14 = vector.broadcast %cst_6 : f32 to vector<1x1x128xf32>
    %15 = arith.addf %13, %14 : vector<1x1x128xf32>
    %16 = math.rsqrt %15 : vector<1x1x128xf32>
    %c0_7 = arith.constant 0 : index
    %c0_8 = arith.constant 0 : index
    %c0_9 = arith.constant 0 : index
    %17 = vector.load %arg3[%c0_7, %c0_8, %c0_9] : memref<1x4x1xf32, #tpu.memory_space<vmem>>, vector<1x4x1xf32>
    %18 = vector.broadcast %7 : vector<1x1x128xf32> to vector<1x4x128xf32>
    %19 = arith.subf %0, %18 : vector<1x4x128xf32>
    %20 = vector.broadcast %16 : vector<1x1x128xf32> to vector<1x4x128xf32>
    %21 = arith.mulf %19, %20 : vector<1x4x128xf32>
    %22 = vector.broadcast %17 : vector<1x4x1xf32> to vector<1x4x128xf32>
    %23 = arith.mulf %21, %22 : vector<1x4x128xf32>
    %c0_10 = arith.constant 0 : index
    %c0_11 = arith.constant 0 : index
    %c0_12 = arith.constant 0 : index
    %24 = vector.load %arg4[%c0_10, %c0_11, %c0_12] : memref<1x4x1xf32, #tpu.memory_space<vmem>>, vector<1x4x1xf32>
    %25 = vector.broadcast %24 : vector<1x4x1xf32> to vector<1x4x128xf32>
    %26 = arith.addf %23, %25 : vector<1x4x128xf32>
    %c0_13 = arith.constant 0 : index
    %c0_14 = arith.constant 0 : index
    %c0_15 = arith.constant 0 : index
    %27 = vector.load %arg5[%c0_13, %c0_14, %c0_15] : memref<1x4x128xf32, #tpu.memory_space<vmem>>, vector<1x4x128xf32>
    tpu.vector_store %arg5[%c0_13, %c0_14, %c0_15], %26 {strides = array<i32>} : memref<1x4x128xf32, #tpu.memory_space<vmem>>, vector<1x4x128xf32>,
    return
  }
  func.func @transform_0(%arg0: i32, %arg1: i32) -> (i32, i32, i32) {
    %c0_i32 = arith.constant 0 : i32
    %c0_i32_0 = arith.constant 0 : i32
    return %arg0, %c0_i32, %arg1 : i32, i32, i32
  }
  func.func @transform_1(%arg0: i32, %arg1: i32) -> (i32, i32, i32) {
    %c0_i32 = arith.constant 0 : i32
    %c0_i32_0 = arith.constant 0 : i32
    %c0_i32_1 = arith.constant 0 : i32
    %c0_i32_2 = arith.constant 0 : i32
    return %c0_i32, %c0_i32_0, %c0_i32_1 : i32, i32, i32
  }
  func.func @transform_2(%arg0: i32, %arg1: i32) -> (i32, i32, i32) {
    %c0_i32 = arith.constant 0 : i32
    %c0_i32_0 = arith.constant 0 : i32
    %c0_i32_1 = arith.constant 0 : i32
    %c0_i32_2 = arith.constant 0 : i32
    return %c0_i32, %c0_i32_0, %c0_i32_1 : i32, i32, i32
  }
  func.func @transform_3(%arg0: i32, %arg1: i32) -> (i32, i32, i32) {
    %c0_i32 = arith.constant 0 : i32
    %c0_i32_0 = arith.constant 0 : i32
    return %arg0, %c0_i32, %arg1 : i32, i32, i32
  }
}

</mosaic_0001>

<llo_original>
// kernel: tpu_custom_call.1
$region0: #{tpu_custom_call.1}
  #allocation0 [shape = 'u32[]', space=smem, size = 0x4, offset = 0x4, fixed_abs, tag = 'smem constant byte address 0x4 - core index']
  #allocation1 [shape = 'u32[144,128]{1,0:T(1,128)}', space=vmem, size = 0x12000, scoped, tag = 'internal scratch']
  %s0 = inlined_call_operand.hbm [shape: f32[2,4,256], index: 0, kind: input, shape index: {}]
  %s1 = inlined_call_operand.hbm [shape: f32[1,4,1], index: 1, kind: input, shape index: {}]
  %s2 = inlined_call_operand.hbm [shape: f32[1,4,1], index: 2, kind: input, shape index: {}]
  %s3 = inlined_call_operand.hbm [shape: f32[2,4,256], index: 3, kind: output, shape index: {}]
  %s4 = sld [smem:[#allocation0]]
  $region57: #{tpu_custom_call.1} parent=0
    _
  %s6 = ssub.s32 1, %s4
  %s7 = scalar_select 0, %s6, %s4
  $region1: #{tpu_custom_call.1} parent=0
    #allocation2 [shape = 'u8[4096]{0}', space=vmem, size = 0x1000, scoped, tag = 'input window, operand 0']
    #allocation3 [shape = 's32[2]{0}', space=sflag, size = 0x8, scoped, tag = 'scoped memory for tpu_custom_call.1']
    #allocation4 [shape = 's32[2]{0}', space=sflag, size = 0x8, scoped, tag = 'scoped memory for tpu_custom_call.1']
    #allocation5 [shape = 'u8[2048]{0}', space=vmem, size = 0x800, scoped, tag = 'input window, operand 1, single buffered']
    #allocation6 [shape = 's32[1]{0}', space=sflag, size = 0x4, scoped, tag = 'scoped memory for tpu_custom_call.1']
    #allocation7 [shape = 'u8[2048]{0}', space=vmem, size = 0x800, scoped, tag = 'input window, operand 2, single buffered']
    #allocation8 [shape = 'u8[4096]{0}', space=vmem, size = 0x1000, scoped, tag = 'output window, operand 0']
    %8 = vsyncpa [#allocation3], 0
    %s9 = scalar_lea.sflag [#allocation3], 1
    %10 = vsyncpa %s9, 0
    %11 = vsyncpa [#allocation6], 0
    %12 = vsyncpa [#allocation4], 0
    %s13 = scalar_lea.sflag [#allocation4], 1
    %14 = vsyncpa %s13, 0
    loop: start=0, step=1, limit=6
    $region2: #{tpu_custom_call.1} parent=1 // loop_pre_header
      _
    $region3: #{tpu_custom_call.1} parent=1 // loop_header
      %s16 = sphi 0, %s20
      %p17 = scmp.ge.s32.totalorder %s16, 6
      %s23 = sphi 0, %s35
      %s24 = sphi 0, %s31
      %s25 = sphi 0, %s23
      %s26 = sphi 0, %s24
      %s27 = sphi 0, %s25
      %s28 = sphi 0, %s26
      %s40 = sphi 0, %s42
      %s43 = sphi 0, %s40
      %s44 = sphi 0, %s43
      %s60 = sphi 0, %s44
      %s64 = sphi 0, %s64
      %s66 = sphi 0, %s64
      %s67 = sphi 0, %s66
      %s81 = sphi 0, %s67
      %s85 = sphi 0, %s85
      %s87 = sphi 0, %s85
      %s88 = sphi 0, %s87
      %s102 = sphi 0, %s88
      %s110 = sphi 0, %s112
      %s113 = sphi 0, %s110
      %s114 = sphi 0, %s113
      %s130 = sphi 0, %s114
    $region4: #{tpu_custom_call.1} parent=1 // loop_header_branch
      %19 = sbr.rel (%p17) target = $region8
    $region5: #{tpu_custom_call.1} parent=1 // loop_body
      %s21 = ssub.s32 %s16, 1
      %s22 = ssub.s32 %s16, 2
      %s29 = sadd.s32 1, %s24
      %p30 = scmp.ge.s32.totalorder %s29, 2
      %s31 = scalar_select %p30, 0, %s29
      %s32 = sadd.s32 1, %s23
      %s33 = scalar_select %p30, %s32, %s23
      %p34 = scmp.ge.s32.totalorder %s33, 2
      %s35 = scalar_select %p34, 0, %s33
      %s36 = ssub.s32 %s23, %s35
      %s37 = ssub.s32 %s24, %s31
      %s38 = sor.u32 %s36, %s37
      %p39 = scmp.eq.s32.totalorder %s38, 0
      %s41 = sadd.s32 %s40, 1
      %s42 = scalar_select %p39, %s40, %s41
      %p45 = pneg %p39
      %p46 = scmp.eq.s32.totalorder %s16, 3
      %p47 = por %p45, %p46
      %p48 = scmp.ne.s32.totalorder %s40, %s43
      %p49 = scmp.eq.s32.totalorder %s16, 0
      %p50 = por %p48, %p49
      %p51 = scmp.ne.s32.totalorder %s40, %s43
      %p52 = scmp.eq.s32.totalorder %s21, 3
      %p53 = por %p51, %p52
      %p54 = scmp.ne.s32.totalorder %s43, %s44
      %p55 = scmp.eq.s32.totalorder %s21, 0
      %p56 = por %p54, %p55
      %p57 = scmp.ne.s32.totalorder %s43, %s44
      %p58 = scmp.eq.s32.totalorder %s22, 3
      %p59 = por %p57, %p58
      %p61 = scmp.ne.s32.totalorder %s44, %s60
      %p62 = scmp.eq.s32.totalorder %s22, 0
      %p63 = por %p61, %p62
      %s65 = sadd.s32 %s64, 1
      %p68 = scmp.eq.s32.totalorder %s16, 3
      %p69 = scmp.ne.s32.totalorder %s64, %s66
      %p70 = scmp.eq.s32.totalorder %s16, 0
      %p71 = por %p69, %p70
      %p72 = scmp.ne.s32.totalorder %s64, %s66
      %p73 = scmp.eq.s32.totalorder %s21, 3
      %p74 = por %p72, %p73
      %p75 = scmp.ne.s32.totalorder %s66, %s67
      %p76 = scmp.eq.s32.totalorder %s21, 0
      %p77 = por %p75, %p76
      %p78 = scmp.ne.s32.totalorder %s66, %s67
      %p79 = scmp.eq.s32.totalorder %s22, 3
      %p80 = por %p78, %p79
      %p82 = scmp.ne.s32.totalorder %s67, %s81
      %p83 = scmp.eq.s32.totalorder %s22, 0
      %p84 = por %p82, %p83
      %s86 = sadd.s32 %s85, 1
      %p89 = scmp.eq.s32.totalorder %s16, 3
      %p90 = scmp.ne.s32.totalorder %s85, %s87
      %p91 = scmp.eq.s32.totalorder %s16, 0
      %p92 = por %p90, %p91
      %p93 = scmp.ne.s32.totalorder %s85, %s87
      %p94 = scmp.eq.s32.totalorder %s21, 3
      %p95 = por %p93, %p94
      %p96 = scmp.ne.s32.totalorder %s87, %s88
      %p97 = scmp.eq.s32.totalorder %s21, 0
      %p98 = por %p96, %p97
      %p99 = scmp.ne.s32.totalorder %s87, %s88
      %p100 = scmp.eq.s32.totalorder %s22, 3
      %p101 = por %p99, %p100
      %p103 = scmp.ne.s32.totalorder %s88, %s102
      %p104 = scmp.eq.s32.totalorder %s22, 0
      %p105 = por %p103, %p104
      %s106 = ssub.s32 %s23, %s35
      %s107 = ssub.s32 %s24, %s31
      %s108 = sor.u32 %s106, %s107
      %p109 = scmp.eq.s32.totalorder %s108, 0
      %s111 = sadd.s32 %s110, 1
      %s112 = scalar_select %p109, %s110, %s111
      %p115 = pneg %p109
      %p116 = scmp.eq.s32.totalorder %s16, 3
      %p117 = por %p115, %p116
      %p118 = scmp.ne.s32.totalorder %s110, %s113
      %p119 = scmp.eq.s32.totalorder %s16, 0
      %p120 = por %p118, %p119
      %p121 = scmp.ne.s32.totalorder %s110, %s113
      %p122 = scmp.eq.s32.totalorder %s21, 3
      %p123 = por %p121, %p122
      %p124 = scmp.ne.s32.totalorder %s113, %s114
      %p125 = scmp.eq.s32.totalorder %s21, 0
      %p126 = por %p124, %p125
      %p127 = scmp.ne.s32.totalorder %s113, %s114
      %p128 = scmp.eq.s32.totalorder %s22, 3
      %p129 = por %p127, %p128
      %p131 = scmp.ne.s32.totalorder %s114, %s130
      %p132 = scmp.eq.s32.totalorder %s22, 0
      %p133 = por %p131, %p132
      %p134 = scmp.le.s32.totalorder 1, %s16
      %p135 = scmp.lt.s32.totalorder %s16, 5
      %p136 = pnand %p134, %p135
      %p137 = pneg %p136
      // Predicated region
      $region9: #{tpu_custom_call.1} parent=5 // pred_check
        _
      $region10: #{tpu_custom_call.1} parent=5 // pred_check_branch
        %139 = sbr.rel (%p136) target = $region12
      $region11: #{tpu_custom_call.1} parent=5 // pred_region
        %s140 = ssub.s32 %s16, 1
        // Predicated region
        $region13: #{tpu_custom_call.1} parent=11 // pred_check
          %p141 = pneg %p77
        $region14: #{tpu_custom_call.1} parent=11 // pred_check_branch
          %143 = sbr.rel (%p141) target = $region16
        $region15: #{tpu_custom_call.1} parent=11 // pred_region
          %s145 = ssub.s32 64, 64
          %146 = vsyncadd [#allocation6], %s145
          %s148 = sshll.u32 [#allocation5], 4
          %s149 = int_to_ptr.vmem [resolvable:$true] %s148
          %151 = dma.hbm_to_vmem [thread:$0]  %s1, 64, %s149, [#allocation6]
        $region16: #{tpu_custom_call.1} parent=11 // pred_fallthru
          _
        // Predicated region
        $region17: #{tpu_custom_call.1} parent=11 // pred_check
          %p152 = pneg %p98
        $region18: #{tpu_custom_call.1} parent=11 // pred_check_branch
          %154 = sbr.rel (%p152) target = $region20
        $region19: #{tpu_custom_call.1} parent=11 // pred_region
          %s156 = ssub.s32 64, 64
          %157 = vsyncadd [#allocation6], %s156
          %s159 = sshll.u32 [#allocation7], 4
          %s160 = int_to_ptr.vmem [resolvable:$true] %s159
          %162 = dma.hbm_to_vmem [thread:$0]  %s2, 64, %s160, [#allocation6]
        $region20: #{tpu_custom_call.1} parent=11 // pred_fallthru
          _
      $region12: #{tpu_custom_call.1} parent=5 // pred_fallthru
        _
      %p163 = scmp.lt.s32.totalorder %s16, 4
      // Predicated region
      $region21: #{tpu_custom_call.1} parent=5 // pred_check
        %p164 = pneg %p163
      $region22: #{tpu_custom_call.1} parent=5 // pred_check_branch
        %166 = sbr.rel (%p164) target = $region24
      $region23: #{tpu_custom_call.1} parent=5 // pred_region
        // Predicated region
        $region25: #{tpu_custom_call.1} parent=23 // pred_check
          %p167 = pneg %p50
        $region26: #{tpu_custom_call.1} parent=23 // pred_check_branch
          %169 = sbr.rel (%p167) target = $region28
        $region27: #{tpu_custom_call.1} parent=23 // pred_region
          %s170 = sand.u32 %s40, 1
          %s171 = scalar_lea.sflag [#allocation3], %s170
          %s172 = sand.u32 %s40, 1
          %s173 = smul.addr %s172, 4
          %s174 = scalar_lea.vmem [#allocation2], %s173
          %s176 = ssub.s32 64, 64
          %177 = vsyncadd %s171, %s176
          %s178 = smul.addr %s23, 2
          %s179 = sadd.s32 %s24, %s178
          %s180 = smul.addr %s179, 64
          %s181 = scalar_lea.hbm %s0, %s180
          %s183 = sshll.u32 %s174, 4
          %s184 = int_to_ptr.vmem [resolvable:$true] %s183
          %186 = dma.hbm_to_vmem [thread:$0]  %s181, 64, %s184, %s171
        $region28: #{tpu_custom_call.1} parent=23 // pred_fallthru
          _
      $region24: #{tpu_custom_call.1} parent=5 // pred_fallthru
        _
      %p187 = scmp.le.s32.totalorder 1, %s16
      %p188 = scmp.lt.s32.totalorder %s16, 5
      %p189 = pnand %p187, %p188
      %p190 = pneg %p189
      // Predicated region
      $region29: #{tpu_custom_call.1} parent=5 // pred_check
        _
      $region30: #{tpu_custom_call.1} parent=5 // pred_check_branch
        %192 = sbr.rel (%p189) target = $region32
      $region31: #{tpu_custom_call.1} parent=5 // pred_region
        %s193 = ssub.s32 %s16, 1
        %s194 = sand.u32 %s43, 1
        %s195 = scalar_lea.sflag [#allocation3], %s194
        %s196 = sand.u32 %s43, 1
        %s197 = smul.addr %s196, 4
        %s198 = scalar_lea.vmem [#allocation2], %s197
        // Predicated region
        $region33: #{tpu_custom_call.1} parent=31 // pred_check
          %p199 = pneg %p56
        $region34: #{tpu_custom_call.1} parent=31 // pred_check_branch
          %201 = sbr.rel (%p199) target = $region36
        $region35: #{tpu_custom_call.1} parent=31 // pred_region
          %202 = dma.done %s195, 64
        $region36: #{tpu_custom_call.1} parent=31 // pred_fallthru
          _
        // Predicated region
        $region37: #{tpu_custom_call.1} parent=31 // pred_check
          %p203 = pneg %p77
        $region38: #{tpu_custom_call.1} parent=31 // pred_check_branch
          %205 = sbr.rel (%p203) target = $region40
        $region39: #{tpu_custom_call.1} parent=31 // pred_region
          %206 = dma.done [#allocation6], 64
        $region40: #{tpu_custom_call.1} parent=31 // pred_fallthru
          _
        // Predicated region
        $region41: #{tpu_custom_call.1} parent=31 // pred_check
          %p207 = pneg %p98
        $region42: #{tpu_custom_call.1} parent=31 // pred_check_branch
          %209 = sbr.rel (%p207) target = $region44
        $region43: #{tpu_custom_call.1} parent=31 // pred_region
          %210 = dma.done [#allocation6], 64
        $region44: #{tpu_custom_call.1} parent=31 // pred_fallthru
          _
        %s211 = sand.u32 %s43, 1
        %s212 = scalar_lea.sflag [#allocation3], %s211
        %s213 = sand.u32 %s43, 1
        %s214 = smul.addr %s213, 4
        %s215 = scalar_lea.vmem [#allocation2], %s214
        %p216 = pneg %p56
        %p217 = pneg %p53
        %p218 = pneg %p77
        %p219 = pneg %p74
        %p220 = pneg %p98
        %p221 = pneg %p95
        %p222 = pneg %p126
        %p223 = pneg %p123
        %s224 = sand.u32 %s113, 1
        %s225 = scalar_lea.sflag [#allocation4], %s224
        %s226 = sand.u32 %s113, 1
        %s227 = smul.addr %s226, 4
        %s228 = scalar_lea.vmem [#allocation8], %s227
        %v229 = vld [vmem:[%s198] sm:$0xf]
        %vm230 = vcmask 1043456
        %v231 = vsel %vm230, %v229, 0.0
        %v232 = vrot.slane %v231, 4
        %v233 = vadd.f32 %v231, %v232
        %v234 = vrot.slane %v233, 2
        %v235 = vadd.f32 %v233, %v234
        %v236 = vrot.slane %v235, 1
        %v237 = vadd.f32 %v235, %v236
        %v238 = vmul.f32 %v229, %v229
        %v239 = vsel %vm230, %v238, 0.0
        %v240 = vrot.slane %v239, 4
        %v241 = vadd.f32 %v239, %v240
        %v242 = vrot.slane %v241, 2
        %v243 = vadd.f32 %v241, %v242
        %v244 = vrot.slane %v243, 1
        %v245 = vadd.f32 %v243, %v244
        %v246 = vmul.f32 %v237, 0.25
        %v247 = vmul.f32 %v245, 0.25
        %v248 = vmul.f32 %v246, %v246
        %v249 = vsub.f32 %v247, %v248
        %v250 = vmax.f32 %v249, 0.0
        %v251 = vadd.f32 %v250, 1e-05
        %v252 = vrsqrt.pop %v251
        %v253 = vld [vmem:[#allocation5] sm:$0xf]
        %v254 = vsub.f32 %v229, %v246
        %v255 = vmul.f32 %v254, %v252
        %257 = vset.pattern.permute.xlu0 0
        %258 = vperm.xlu0 %257, %v253
        %v259 = vpop.permute.xlu0 %258
        %v261 = vmul.f32 %v255, %v259
        %v262 = vld [vmem:[#allocation7] sm:$0xf]
        %264 = vset.pattern.permute.xlu0 0
        %265 = vperm.xlu0 %264, %v262
        %v266 = vpop.permute.xlu0 %265
        %v268 = vadd.f32 %v261, %v266
        %269 = vst [vmem:[%s228] sm:$0xf] %v268
        %s270 = sand.u32 %s113, 1
        %s271 = scalar_lea.sflag [#allocation4], %s270
        %s272 = sand.u32 %s113, 1
        %s273 = smul.addr %s272, 4
        %s274 = scalar_lea.vmem [#allocation8], %s273
        // Predicated region
        $region45: #{tpu_custom_call.1} parent=31 // pred_check
          %p275 = pneg %p123
        $region46: #{tpu_custom_call.1} parent=31 // pred_check_branch
          %277 = sbr.rel (%p275) target = $region48
        $region47: #{tpu_custom_call.1} parent=31 // pred_region
          %s279 = ssub.s32 64, 64
          %280 = vsyncadd %s271, %s279
          %s281 = smul.addr %s25, 2
          %s282 = sadd.s32 %s26, %s281
          %s283 = smul.addr %s282, 64
          %s284 = scalar_lea.hbm %s3, %s283
          %s286 = sshll.u32 %s274, 4
          %s287 = int_to_ptr.vmem [resolvable:$true] %s286
          %289 = dma.vmem_to_hbm [thread:$0]  %s287, 64, %s284, %s271
        $region48: #{tpu_custom_call.1} parent=31 // pred_fallthru
          _
      $region32: #{tpu_custom_call.1} parent=5 // pred_fallthru
        _
      %p290 = scmp.le.s32.totalorder 2, %s16
      // Predicated region
      $region49: #{tpu_custom_call.1} parent=5 // pred_check
        %p291 = pneg %p290
      $region50: #{tpu_custom_call.1} parent=5 // pred_check_branch
        %293 = sbr.rel (%p291) target = $region52
      $region51: #{tpu_custom_call.1} parent=5 // pred_region
        %s294 = ssub.s32 %s16, 2
        // Predicated region
        $region53: #{tpu_custom_call.1} parent=51 // pred_check
          %p295 = pneg %p129
        $region54: #{tpu_custom_call.1} parent=51 // pred_check_branch
          %297 = sbr.rel (%p295) target = $region56
        $region55: #{tpu_custom_call.1} parent=51 // pred_region
          %s298 = sand.u32 %s114, 1
          %s299 = scalar_lea.sflag [#allocation4], %s298
          %s300 = sand.u32 %s114, 1
          %s301 = smul.addr %s300, 4
          %s302 = scalar_lea.vmem [#allocation8], %s301
          %303 = dma.done %s299, 64
        $region56: #{tpu_custom_call.1} parent=51 // pred_fallthru
          _
      $region52: #{tpu_custom_call.1} parent=5 // pred_fallthru
        _
    $region6: #{tpu_custom_call.1} parent=1 // loop_footer
      %s20 = sadd.s32 1, %s16
    $region7: #{tpu_custom_call.1} parent=1 // loop_footer_branch
      %15 = sbr.rel target = $region3
    $region8: #{tpu_custom_call.1} parent=1 // loop_exit
      _
    %304 = vsyncpa [#allocation3], 1
    %s305 = scalar_lea.sflag [#allocation3], 1
    %306 = vsyncpa %s305, 1
    %307 = vsyncpa [#allocation6], 1
    %308 = vsyncpa [#allocation4], 1
    %s309 = scalar_lea.sflag [#allocation4], 1
    %310 = vsyncpa %s309, 1

</llo_original>
